<compile_context>
chip_gen: v7x
topology: tpu7x:2x2x1
jax: 0.10.0
libtpu: 0.0.40
codegen_flags: <defaults>
</compile_context>

<pallas_src>
from functools import partial

import jax
import jax.numpy as jnp
from jax.experimental import pallas as pl
from jax.experimental.pallas import tpu as pltpu


def _attention_kernel(p_valid, enc_ref, dec_ref,
                      we_ref, wd_ref, bc_ref, wf_ref, bf_ref,
                      awe_ref, alpha_ref):
    Bt, P, E = enc_ref.shape
    A = we_ref.shape[1]

    enc = enc_ref[...]                                     # (Bt, P, E) bf16
    dec = dec_ref[...]                                     # (Bt, D)    f32

    # att1 = encoder_att(encoder_out): one (Bt*P, E) @ (E, A) bf16 MXU matmul.
    # P is padded to a multiple of 8 host-side, so this reshape is a view.
    att1 = jnp.dot(enc.reshape(Bt * P, E), we_ref[...],
                   preferred_element_type=jnp.float32)     # (Bt*P, A) f32

    # att2 = decoder_att(decoder_hidden)
    att2 = jnp.dot(dec.astype(jnp.bfloat16), wd_ref[...],
                   preferred_element_type=jnp.float32)     # (Bt, A) f32

    # relu(att1 + att2.unsqueeze(1)) with the folded bias (be + bd) added once.
    pre = jax.nn.relu(att1.reshape(Bt, P, A) + att2[:, None, :] + bc_ref[...])

    # full_att (A -> 1) as a lane reduction on the VPU/XLU (no 1-column MXU pass).
    att = jnp.sum(pre * wf_ref[...], axis=-1) + bf_ref[...]        # (Bt, P) f32

    # Mask padded pixel positions (only emitted when P was padded host-side).
    if p_valid != P:
        pix = jax.lax.broadcasted_iota(jnp.int32, att.shape, 1)
        att = jnp.where(pix < p_valid, att, jnp.float32(-1e30))

    # softmax over the pixel (lane) axis; EUP reciprocal instead of a VALU divide.
    m = jnp.max(att, axis=-1, keepdims=True)
    e = jnp.exp(att - m)
    alpha = e * pl.reciprocal(jnp.sum(e, axis=-1, keepdims=True), approx=True)

    # attention_weighted_encoding: batched (1,P)@(P,E) bf16 MXU contraction, f32 acc.
    awe = jnp.einsum('bqp,bpe->bqe', alpha.astype(jnp.bfloat16)[:, None, :],
                     enc, preferred_element_type=jnp.float32)      # (Bt, 1, E)

    awe_ref[...] = awe.reshape(Bt, E)
    alpha_ref[...] = alpha


def _vmem_limit_bytes():
    """Generation-aware VMEM limit: 75% of physical (~96 MiB v5e/v6e, ~48 MiB v7x)."""
    cap = 64 << 20                      # conservative fallback == v7x physical VMEM
    try:
        cap = int(pltpu.get_tpu_info().vmem_capacity_bytes)
    except Exception:
        pass
    return int(cap) * 3 // 4


def _choose_block_batch(B, P, E, D, A, *, enc_bytes, budget_bytes):
    """Largest sublane-aligned batch block whose full VMEM footprint fits.

    Counts the double-buffered streaming blocks (encoder, decoder, outputs) and
    the f32 intermediates (att1/relu, softmax temps, awe accumulator); resident
    single-buffered weights are already subtracted from `budget_bytes`.
    Keeps >= 2 grid steps when possible so both v7x TensorCores get work.
    """
    def cost(bt):
        stream = 2 * bt * P * E * enc_bytes            # encoder block (double-buffered)
        stream += 2 * bt * D * 4                       # decoder block
        stream += 2 * bt * (E + P) * 4                 # output blocks
        inter = 2 * bt * P * A * 4                     # att1 + relu intermediate (f32)
        inter += 6 * bt * P * 4 + bt * E * 4           # softmax temps + awe accumulator
        return stream + inter

    if B <= 8:
        return B                                        # block == full batch is always legal
    cands = [bt for bt in range(8, B + 1, 8) if B % bt == 0]
    if not cands:                                       # unreachable: wrapper pads B to 8k
        return B
    fitting = [bt for bt in cands if cost(bt) <= budget_bytes]
    if not fitting:
        # TODO(synk): also tile the pixel/encoder axes if even Bt=8 overflows VMEM.
        return cands[0]
    multi = [bt for bt in fitting if bt <= B // 2]      # >= 2 grid steps for megacore
    return max(multi) if multi else max(fitting)


def _const_spec(shape):
    """BlockSpec for a grid-invariant operand; single-buffered when supported."""
    index_map = lambda b, _n=len(shape): (0,) * _n
    try:
        return pl.BlockSpec(shape, index_map, pipeline_mode=pl.Buffered(1))
    except TypeError:       # older jax without pipeline_mode: default double-buffer
        return pl.BlockSpec(shape, index_map)


def attention_forward(encoder_out, decoder_hidden, params, *, block_batch=None):
    """encoder_out: (B, P, E); decoder_hidden: (B, D). Returns ((B, E), (B, P))."""
    B, P, E = encoder_out.shape
    D = decoder_hidden.shape[1]
    A = params["we"].shape[1]

    # -- host-side prep: bf16 MXU operands, folded bias, tile-friendly padding --
    enc = encoder_out.astype(jnp.bfloat16)
    dec = decoder_hidden.astype(jnp.float32)
    we = params["we"].astype(jnp.bfloat16)                       # (E, A)
    wd = params["wd"].astype(jnp.bfloat16)                       # (D, A)
    bc = (params["be"] + params["bd"]).reshape(1, A).astype(jnp.float32)
    wf = params["wf"].reshape(1, A).astype(jnp.float32)          # (A,1) weight as a row
    bf = params["bf"].reshape(1, 1).astype(jnp.float32)

    P_pad = P if P % 8 == 0 else -(-P // 8) * 8
    B_pad = B if (B <= 8 or B % 8 == 0) else -(-B // 8) * 8
    if P_pad != P:
        enc = jnp.pad(enc, ((0, 0), (0, P_pad - P), (0, 0)))
    if B_pad != B:
        enc = jnp.pad(enc, ((0, B_pad - B), (0, 0), (0, 0)))
        dec = jnp.pad(dec, ((0, B_pad - B), (0, 0)))

    vmem_limit = _vmem_limit_bytes()
    resident = (E * A + D * A) * 2 + (2 * A + 1) * 4             # single-buffered weights
    if block_batch is None:
        block_batch = _choose_block_batch(
            B_pad, P_pad, E, D, A, enc_bytes=2,
            budget_bytes=vmem_limit - resident - (2 << 20))
    Bt = block_batch
    assert B_pad % Bt == 0, "block_batch must divide the (padded) batch size"
    grid = (B_pad // Bt,)

    in_specs = [
        pl.BlockSpec((Bt, P_pad, E), lambda b: (b, 0, 0)),       # encoder block
        pl.BlockSpec((Bt, D),        lambda b: (b, 0)),          # decoder block
        _const_spec((E, A)),                                     # W_enc
        _const_spec((D, A)),                                     # W_dec
        _const_spec((1, A)),                                     # b_enc + b_dec (folded)
        _const_spec((1, A)),                                     # W_full as a row vector
        _const_spec((1, 1)),                                     # b_full
    ]
    out_specs = (
        pl.BlockSpec((Bt, E),     lambda b: (b, 0)),
        pl.BlockSpec((Bt, P_pad), lambda b: (b, 0)),
    )
    out_shapes = (
        jax.ShapeDtypeStruct((B_pad, E), jnp.float32),           # attention_weighted_encoding
        jax.ShapeDtypeStruct((B_pad, P_pad), jnp.float32),       # alpha
    )

    cost = pl.CostEstimate(
        flops=(2 * B_pad * P_pad * E * A + 2 * B_pad * D * A
               + 2 * B_pad * P_pad * A + 2 * B_pad * P_pad * E),
        transcendentals=B_pad * P_pad + B_pad,
        bytes_accessed=(2 * B_pad * P_pad * E + 4 * B_pad * D
                        + 2 * (E * A + D * A) + 4 * B_pad * (E + P_pad)),
    )

    awe, alpha = pl.pallas_call(
        partial(_attention_kernel, P),
        out_shape=out_shapes,
        grid_spec=pltpu.PrefetchScalarGridSpec(
            num_scalar_prefetch=0,
            grid=grid,
            in_specs=in_specs,
            out_specs=out_specs,
        ),
        compiler_params=pltpu.CompilerParams(
            dimension_semantics=("parallel",),
            vmem_limit_bytes=vmem_limit),
        cost_estimate=cost,
    )(enc, dec, we, wd, bc, wf, bf)

    if B_pad != B or P_pad != P:
        awe = awe[:B]
        alpha = alpha[:B, :P]
    return awe, alpha


def init_params(key, encoder_dim, decoder_dim, attention_dim):
    ks = jax.random.split(key, 6)
    scale = 0.05
    # Stored as (in_dim, out_dim), i.e. already transposed relative to nn.Linear.weight
    return {
        "we": scale * jax.random.normal(ks[0], (encoder_dim, attention_dim), jnp.float32),
        "be": scale * jax.random.normal(ks[1], (attention_dim,), jnp.float32),
        "wd": scale * jax.random.normal(ks[2], (decoder_dim, attention_dim), jnp.float32),
        "bd": scale * jax.random.normal(ks[3], (attention_dim,), jnp.float32),
        "wf": scale * jax.random.normal(ks[4], (attention_dim, 1), jnp.float32),
        "bf": scale * jax.random.normal(ks[5], (1,), jnp.float32),
    }


def reference_forward(encoder_out, decoder_hidden, params):
    """Plain-JAX (f32) mirror of the PyTorch forward for a correctness check."""
    att1 = encoder_out @ params["we"] + params["be"]                 # (B, P, A)
    att2 = decoder_hidden @ params["wd"] + params["bd"]              # (B, A)
    att = (jax.nn.relu(att1 + att2[:, None, :]) @ params["wf"] + params["bf"])[..., 0]
    alpha = jax.nn.softmax(att, axis=1)
    awe = jnp.sum(encoder_out * alpha[:, :, None], axis=1)
    return awe, alpha


if __name__ == "__main__":
    B, P = 2, 16          # batch, num_pixels
    ENC_DIM, DEC_DIM, ATT_DIM = 32, 24, 16

    key = jax.random.PRNGKey(0)
    k_enc, k_dec, k_par = jax.random.split(key, 3)

    encoder_out = jax.random.normal(k_enc, (B, P, ENC_DIM), jnp.float32)
    decoder_hidden = jax.random.normal(k_dec, (B, DEC_DIM), jnp.float32)
    params = init_params(k_par, ENC_DIM, DEC_DIM, ATT_DIM)

    awe, alpha = attention_forward(encoder_out, decoder_hidden, params)
    jax.block_until_ready((awe, alpha))

    awe_ref, alpha_ref = reference_forward(encoder_out, decoder_hidden, params)
    # bf16 MXU operands + approx EUP reciprocal => looser tolerance than pure f32.
    assert jnp.allclose(awe, awe_ref, atol=2e-2, rtol=2e-2), "awe mismatch"
    assert jnp.allclose(alpha, alpha_ref, atol=2e-2, rtol=2e-2), "alpha mismatch"

    print("KERNEL_OK")
</pallas_src>

<mosaic_0001>
module attributes {stable_mosaic.version = 11 : i64} {
  func.func @_attention_kernel(%arg0: i32, %arg1: memref<2x16x32xbf16, #tpu.memory_space<vmem>>, %arg2: memref<2x24xf32, #tpu.memory_space<vmem>>, %arg3: memref<32x16xbf16, #tpu.memory_space<vmem>>, %arg4: memref<24x16xbf16, #tpu.memory_space<vmem>>, %arg5: memref<1x16xf32, #tpu.memory_space<vmem>>, %arg6: memref<1x16xf32, #tpu.memory_space<vmem>>, %arg7: memref<1x1xf32, #tpu.memory_space<vmem>>, %arg8: memref<2x32xf32, #tpu.memory_space<vmem>>, %arg9: memref<2x16xf32, #tpu.memory_space<vmem>>) attributes {dimension_semantics = [#tpu.dimension_semantics<parallel>], iteration_bounds = array<i64: 1>, scalar_prefetch = 0 : i64, scratch_operands = 0 : i64, tpu.core_type = #tpu.core_type<tc>, window_params = [{transform_indices = @transform_0, window_bounds = array<i64: 2, 16, 32>}, {transform_indices = @transform_1, window_bounds = array<i64: 2, 24>}, {pipeline_mode = #tpu.pipeline_mode<synchronous>, transform_indices = @transform_2, window_bounds = array<i64: 32, 16>}, {pipeline_mode = #tpu.pipeline_mode<synchronous>, transform_indices = @transform_3, window_bounds = array<i64: 24, 16>}, {pipeline_mode = #tpu.pipeline_mode<synchronous>, transform_indices = @transform_4, window_bounds = array<i64: 1, 16>}, {pipeline_mode = #tpu.pipeline_mode<synchronous>, transform_indices = @transform_5, window_bounds = array<i64: 1, 16>}, {pipeline_mode = #tpu.pipeline_mode<synchronous>, transform_indices = @transform_6, window_bounds = array<i64: 1, 1>}, {transform_indices = @transform_7, window_bounds = array<i64: 2, 32>}, {transform_indices = @transform_8, window_bounds = array<i64: 2, 16>}]} {
    %c0 = arith.constant 0 : index
    %c0_0 = arith.constant 0 : index
    %c0_1 = arith.constant 0 : index
    %0 = vector.load %arg1[%c0, %c0_0, %c0_1] : memref<2x16x32xbf16, #tpu.memory_space<vmem>>, vector<2x16x32xbf16>
    %c0_2 = arith.constant 0 : index
    %c0_3 = arith.constant 0 : index
    %1 = vector.load %arg2[%c0_2, %c0_3] : memref<2x24xf32, #tpu.memory_space<vmem>>, vector<2x24xf32>
    %2 = vector.shape_cast %0 : vector<2x16x32xbf16> to vector<32x32xbf16>
    %c0_4 = arith.constant 0 : index
    %c0_5 = arith.constant 0 : index
    %3 = vector.load %arg3[%c0_4, %c0_5] : memref<32x16xbf16, #tpu.memory_space<vmem>>, vector<32x16xbf16>
    %cst = arith.constant dense<0.000000e+00> : vector<32x16xf32>
    %4 = tpu.matmul %2, %3, %cst {dimension_numbers = #tpu.dot_dimension_numbers<[1], [0], [0], [1], [0, 0, 1, 1], [], []>} : vector<32x32xbf16>, vector<32x16xbf16>, vector<32x16xf32> -> vector<32x16xf32>
    %5 = arith.truncf %1 : vector<2x24xf32> to vector<2x24xbf16>
    %c0_6 = arith.constant 0 : index
    %c0_7 = arith.constant 0 : index
    %6 = vector.load %arg4[%c0_6, %c0_7] : memref<24x16xbf16, #tpu.memory_space<vmem>>, vector<24x16xbf16>
    %cst_8 = arith.constant dense<0.000000e+00> : vector<2x16xf32>
    %7 = tpu.matmul %5, %6, %cst_8 {dimension_numbers = #tpu.dot_dimension_numbers<[1], [0], [0], [1], [0, 0, 1, 1], [], []>} : vector<2x24xbf16>, vector<24x16xbf16>, vector<2x16xf32> -> vector<2x16xf32>
    %8 = vector.shape_cast %4 : vector<32x16xf32> to vector<2x16x16xf32>
    %9 = vector.shape_cast %7 : vector<2x16xf32> to vector<2x1x16xf32>
    %10 = vector.broadcast %9 : vector<2x1x16xf32> to vector<2x16x16xf32>
    %11 = arith.addf %8, %10 : vector<2x16x16xf32>
    %c0_9 = arith.constant 0 : index
    %c0_10 = arith.constant 0 : index
    %12 = vector.load %arg5[%c0_9, %c0_10] : memref<1x16xf32, #tpu.memory_space<vmem>>, vector<1x16xf32>
    %13 = vector.shape_cast %12 : vector<1x16xf32> to vector<1x1x16xf32>
    %14 = vector.broadcast %13 : vector<1x1x16xf32> to vector<2x16x16xf32>
    %15 = arith.addf %11, %14 : vector<2x16x16xf32>
    %cst_11 = arith.constant 0.000000e+00 : f32
    %16 = vector.broadcast %cst_11 : f32 to vector<2x16x16xf32>
    %17 = arith.maximumf %15, %16 : vector<2x16x16xf32>
    %c0_12 = arith.constant 0 : index
    %c0_13 = arith.constant 0 : index
    %18 = vector.load %arg6[%c0_12, %c0_13] : memref<1x16xf32, #tpu.memory_space<vmem>>, vector<1x16xf32>
    %19 = vector.shape_cast %18 : vector<1x16xf32> to vector<1x1x16xf32>
    %20 = vector.broadcast %19 : vector<1x1x16xf32> to vector<2x16x16xf32>
    %21 = arith.mulf %17, %20 : vector<2x16x16xf32>
    %cst_14 = arith.constant dense<0.000000e+00> : vector<2x16xf32>
    %22 = vector.multi_reduction <add>, %21, %cst_14 [2] : vector<2x16x16xf32> to vector<2x16xf32>
    %c0_15 = arith.constant 0 : index
    %c0_16 = arith.constant 0 : index
    %23 = vector.load %arg7[%c0_15, %c0_16] : memref<1x1xf32, #tpu.memory_space<vmem>>, vector<1x1xf32>
    %24 = vector.broadcast %23 : vector<1x1xf32> to vector<2x16xf32>
    %25 = arith.addf %22, %24 : vector<2x16xf32>
    %cst_17 = arith.constant dense<0xFF800000> : vector<2xf32>
    %26 = vector.multi_reduction <maximumf>, %25, %cst_17 [1] : vector<2x16xf32> to vector<2xf32>
    %27 = vector.shape_cast %26 : vector<2xf32> to vector<2x1xf32>
    %28 = vector.broadcast %27 : vector<2x1xf32> to vector<2x16xf32>
    %29 = arith.subf %25, %28 : vector<2x16xf32>
    %30 = math.exp %29 : vector<2x16xf32>
    %cst_18 = arith.constant dense<0.000000e+00> : vector<2xf32>
    %31 = vector.multi_reduction <add>, %30, %cst_18 [1] : vector<2x16xf32> to vector<2xf32>
    %32 = vector.shape_cast %31 : vector<2xf32> to vector<2x1xf32>
    %33 = tpu.reciprocal %32 {approx = true} : vector<2x1xf32> -> vector<2x1xf32>
    %34 = vector.broadcast %33 : vector<2x1xf32> to vector<2x16xf32>
    %35 = arith.mulf %30, %34 : vector<2x16xf32>
    %36 = arith.truncf %35 : vector<2x16xf32> to vector<2x16xbf16>
    %37 = vector.shape_cast %36 : vector<2x16xbf16> to vector<2x1x16xbf16>
    "tpu.trace_start"() <{level = 10 : i32, message = "bqp,bpe->bqe"}> : () -> ()
    %cst_19 = arith.constant dense<0.000000e+00> : vector<2x1x32xf32>
    %38 = tpu.matmul %37, %0, %cst_19 {dimension_numbers = #tpu.dot_dimension_numbers<[2], [1], [1], [2], [0, 0, 0, 1, 1, 2], [0], [0]>} : vector<2x1x16xbf16>, vector<2x16x32xbf16>, vector<2x1x32xf32> -> vector<2x1x32xf32>
    "tpu.trace_stop"() : () -> ()
    %39 = vector.shape_cast %38 : vector<2x1x32xf32> to vector<2x32xf32>
    %c0_20 = arith.constant 0 : index
    %c0_21 = arith.constant 0 : index
    %40 = vector.load %arg8[%c0_20, %c0_21] : memref<2x32xf32, #tpu.memory_space<vmem>>, vector<2x32xf32>
    tpu.vector_store %arg8[%c0_20, %c0_21], %39 {strides = array<i32>} : memref<2x32xf32, #tpu.memory_space<vmem>>, vector<2x32xf32>,
    %c0_22 = arith.constant 0 : index
    %c0_23 = arith.constant 0 : index
    %41 = vector.load %arg9[%c0_22, %c0_23] : memref<2x16xf32, #tpu.memory_space<vmem>>, vector<2x16xf32>
    tpu.vector_store %arg9[%c0_22, %c0_23], %35 {strides = array<i32>} : memref<2x16xf32, #tpu.memory_space<vmem>>, vector<2x16xf32>,
    return
  }
  func.func @transform_0(%arg0: i32) -> (i32, i32, i32) {
    %c0_i32 = arith.constant 0 : i32
    %c0_i32_0 = arith.constant 0 : i32
    %c0_i32_1 = arith.constant 0 : i32
    return %arg0, %c0_i32, %c0_i32_0 : i32, i32, i32
  }
  func.func @transform_1(%arg0: i32) -> (i32, i32) {
    %c0_i32 = arith.constant 0 : i32
    %c0_i32_0 = arith.constant 0 : i32
    return %arg0, %c0_i32 : i32, i32
  }
  func.func @transform_2(%arg0: i32) -> (i32, i32) {
    %c0_i32 = arith.constant 0 : i32
    %c0_i32_0 = arith.constant 0 : i32
    %c0_i32_1 = arith.constant 0 : i32
    return %c0_i32, %c0_i32_0 : i32, i32
  }
  func.func @transform_3(%arg0: i32) -> (i32, i32) {
    %c0_i32 = arith.constant 0 : i32
    %c0_i32_0 = arith.constant 0 : i32
    %c0_i32_1 = arith.constant 0 : i32
    return %c0_i32, %c0_i32_0 : i32, i32
  }
  func.func @transform_4(%arg0: i32) -> (i32, i32) {
    %c0_i32 = arith.constant 0 : i32
    %c0_i32_0 = arith.constant 0 : i32
    %c0_i32_1 = arith.constant 0 : i32
    return %c0_i32, %c0_i32_0 : i32, i32
  }
  func.func @transform_5(%arg0: i32) -> (i32, i32) {
    %c0_i32 = arith.constant 0 : i32
    %c0_i32_0 = arith.constant 0 : i32
    %c0_i32_1 = arith.constant 0 : i32
    return %c0_i32, %c0_i32_0 : i32, i32
  }
  func.func @transform_6(%arg0: i32) -> (i32, i32) {
    %c0_i32 = arith.constant 0 : i32
    %c0_i32_0 = arith.constant 0 : i32
    %c0_i32_1 = arith.constant 0 : i32
    return %c0_i32, %c0_i32_0 : i32, i32
  }
  func.func @transform_7(%arg0: i32) -> (i32, i32) {
    %c0_i32 = arith.constant 0 : i32
    %c0_i32_0 = arith.constant 0 : i32
    return %arg0, %c0_i32 : i32, i32
  }
  func.func @transform_8(%arg0: i32) -> (i32, i32) {
    %c0_i32 = arith.constant 0 : i32
    %c0_i32_0 = arith.constant 0 : i32
    return %arg0, %c0_i32 : i32, i32
  }
}

</mosaic_0001>

<llo_original>
// kernel: tpu_custom_call.1
$region0: #{tpu_custom_call.1}
  #allocation0 [shape = 'u32[]', space=smem, size = 0x4, offset = 0x4, fixed_abs, tag = 'smem constant byte address 0x4 - core index']
  #allocation1 [shape = 'u32[144,128]{1,0:T(1,128)}', space=vmem, size = 0x12000, scoped, tag = 'internal scratch']
  #allocation2 [shape = 'f32[1,1]{1,0:T(1,128)S(1)}', space=vmem, size = 0x200, scoped, tag = 'scoped memory for tpu_custom_call.1']
  %s0 = inlined_call_operand.vmem [shape: bf16[2,16,32], index: 0, kind: input, shape index: {}]
  %s1 = inlined_call_operand.vmem [shape: f32[2,24], index: 1, kind: input, shape index: {}]
  %s2 = inlined_call_operand.vmem [shape: bf16[32,16], index: 2, kind: input, shape index: {}]
  %s3 = inlined_call_operand.vmem [shape: bf16[24,16], index: 3, kind: input, shape index: {}]
  %s4 = inlined_call_operand.vmem [shape: f32[1,16], index: 4, kind: input, shape index: {}]
  %s5 = inlined_call_operand.vmem [shape: f32[1,16], index: 5, kind: input, shape index: {}]
  %s6 = inlined_call_operand.<no memory space> [shape: f32[1,1], index: 6, kind: input, shape index: {}]
  %s7 = inlined_call_operand.hbm [shape: f32[2,32], index: 7, kind: output, shape index: {0}]
  %s8 = inlined_call_operand.hbm [shape: f32[2,16], index: 8, kind: output, shape index: {1}]
  %9 = xla_tuple %s7, %s8
  %s10 = sld [smem:[#allocation0]]
  $region46: #{tpu_custom_call.1} parent=0
    _
  %s12 = ssub.s32 1, %s10
  %s13 = scalar_select 0, %s12, %s10
  %v14 = vstv %s6
  %15 = vst [vmem:[#allocation2] sm:$0x1] %v14
  $region1: #{tpu_custom_call.1} parent=0
    #allocation3 [shape = 'u8[1024]{0}', space=vmem, size = 0x400, scoped, tag = 'output window, operand 0, single buffered']
    #allocation4 [shape = 's32[1]{0}', space=sflag, size = 0x4, scoped, tag = 'scoped memory for tpu_custom_call.1']
    #allocation5 [shape = 'u8[1024]{0}', space=vmem, size = 0x400, scoped, tag = 'output window, operand 1, single buffered']
    #allocation6 [shape = 's32[1]{0}', space=sflag, size = 0x4, scoped, tag = 'scoped memory for tpu_custom_call.1']
    %16 = vsyncpa [#allocation4], 0
    %17 = vsyncpa [#allocation6], 0
    // Predicated region
    $region2: #{tpu_custom_call.1} parent=1 // pred_check
      _
    $region3: #{tpu_custom_call.1} parent=1 // pred_check_branch
      %19 = sbr.rel (0) target = $region5
    $region4: #{tpu_custom_call.1} parent=1 // pred_region
      _
    $region5: #{tpu_custom_call.1} parent=1 // pred_fallthru
      _
    // Predicated region
    $region6: #{tpu_custom_call.1} parent=1 // pred_check
      _
    $region7: #{tpu_custom_call.1} parent=1 // pred_check_branch
      %21 = sbr.rel (0) target = $region9
    $region8: #{tpu_custom_call.1} parent=1 // pred_region
      _
    $region9: #{tpu_custom_call.1} parent=1 // pred_fallthru
      _
    // Predicated region
    $region10: #{tpu_custom_call.1} parent=1 // pred_check
      _
    $region11: #{tpu_custom_call.1} parent=1 // pred_check_branch
      %23 = sbr.rel (0) target = $region13
    $region12: #{tpu_custom_call.1} parent=1 // pred_region
      _
    $region13: #{tpu_custom_call.1} parent=1 // pred_fallthru
      _
    // Predicated region
    $region14: #{tpu_custom_call.1} parent=1 // pred_check
      _
    $region15: #{tpu_custom_call.1} parent=1 // pred_check_branch
      %25 = sbr.rel (0) target = $region17
    $region16: #{tpu_custom_call.1} parent=1 // pred_region
      _
    $region17: #{tpu_custom_call.1} parent=1 // pred_fallthru
      _
    // Predicated region
    $region18: #{tpu_custom_call.1} parent=1 // pred_check
      _
    $region19: #{tpu_custom_call.1} parent=1 // pred_check_branch
      %27 = sbr.rel (0) target = $region21
    $region20: #{tpu_custom_call.1} parent=1 // pred_region
      _
    $region21: #{tpu_custom_call.1} parent=1 // pred_fallthru
      _
    // Predicated region
    $region22: #{tpu_custom_call.1} parent=1 // pred_check
      _
    $region23: #{tpu_custom_call.1} parent=1 // pred_check_branch
      %29 = sbr.rel (0) target = $region25
    $region24: #{tpu_custom_call.1} parent=1 // pred_region
      _
    $region25: #{tpu_custom_call.1} parent=1 // pred_fallthru
      _
    // Predicated region
    $region26: #{tpu_custom_call.1} parent=1 // pred_check
      _
    $region27: #{tpu_custom_call.1} parent=1 // pred_check_branch
      %31 = sbr.rel (0) target = $region29
    $region28: #{tpu_custom_call.1} parent=1 // pred_region
      _
    $region29: #{tpu_custom_call.1} parent=1 // pred_fallthru
      _
    %v33 = vld [vmem:[%s0] sm:$0xf]
    %v34 = vld [vmem:[%s0 + $0x4] sm:$0xf]
    %v35 = vld [vmem:[%s0 + $0x8] sm:$0xf]
    %v36 = vld [vmem:[%s0 + $0xc] sm:$0xf]
    %v37 = vld [vmem:[%s1] sm:$0x3]
    %v38 = vld [vmem:[%s2] sm:$0xf]
    %v39 = vld [vmem:[%s2 + $0x4] sm:$0xf]
    %v40 = vld [vmem:[%s2 + $0x8] sm:$0xf]
    %v41 = vld [vmem:[%s2 + $0xc] sm:$0xf]
    %v46 = vunpack.c.l.b16 %v33
    %v47 = vunpack.c.l.b16 %v34
    %v48 = vunpack.c.l.b16 %v35
    %v49 = vunpack.c.l.b16 %v36
    %v50 = vpack.c.b16 %v47, %v46
    %v51 = vpack.c.b16 %v49, %v48
    %v56 = vunpack.c.l.b16 %v38
    %v57 = vunpack.c.l.b16 %v39
    %v58 = vunpack.c.l.b16 %v40
    %v59 = vunpack.c.l.b16 %v41
    %v60 = vpack.c.b16 %v57, %v56
    %v61 = vpack.c.b16 %v59, %v58
    %vm64 = vcmask 261120
    %v66 = vsel %vm64, %v50, 0
    %v69 = vsel %vm64, %v51, 0
    %71 = vmatprep.subr.bf16.mxu0 0
    %72 = vmatpush1.bf16.msra.mxu0 %v60
    %73 = vmatprep.subr.bf16.mxu0 0
    %74 = vmatpush1.bf16.msra.mxu0 %v61
    %75 = vmatprep.subr.bf16.mxu0 0
    %76 = vmatpush1.bf16.msra.mxu0 0
    %77 = vmatprep.subr.bf16.mxu0 0
    %78 = vmatpush1.bf16.msra.mxu0 0
    %79 = vmatprep.subr.bf16.mxu0 0
    %80 = vmatpush1.bf16.msra.mxu0 0
    %81 = vmatprep.subr.bf16.mxu0 0
    %82 = vmatpush1.bf16.msra.mxu0 0
    %83 = vmatprep.subr.bf16.mxu0 0
    %84 = vmatpush1.bf16.msra.mxu0 0
    %85 = vmatprep.subr.bf16.mxu0 0
    %86 = vmatpush1.bf16.msra.mxu0 0
    %87 = vmatprep.subr.bf16.mxu0 0
    %88 = vmatpush1.bf16.msra.mxu0 0
    %89 = vmatprep.subr.bf16.mxu0 0
    %90 = vmatpush1.bf16.msra.mxu0 0
    %91 = vmatprep.subr.bf16.mxu0 0
    %92 = vmatpush1.bf16.msra.mxu0 0
    %93 = vmatprep.subr.bf16.mxu0 0
    %94 = vmatpush1.bf16.msra.mxu0 0
    %95 = vmatprep.subr.bf16.mxu0 0
    %96 = vmatpush1.bf16.msra.mxu0 0
    %97 = vmatprep.subr.bf16.mxu0 0
    %98 = vmatpush1.bf16.msra.mxu0 0
    %99 = vmatprep.subr.bf16.mxu0 0
    %100 = vmatpush1.bf16.msra.mxu0 0
    %101 = vmatprep.subr.bf16.mxu0 0
    %102 = vmatpush1.bf16.msra.mxu0 0
    %103 = vmatprep.mubr.bf16.mxu0 0
    %104 = vmatmul.mubr.bf16.gmra.mrb[0].mxu0 %v66
    %v105 = vpop.f32.mrb[0].mxu0
    %v106 = vadd.f32 0.0, %v105
    %v107 = vpop.f32.mrb[0].mxu0
    %v108 = vpop.f32.mrb[0].mxu0
    %v109 = vadd.f32 0.0, %v108
    %v110 = vpop.f32.mrb[0].mxu0
    %111 = vmatprep.mubr.bf16.mxu0 0
    %112 = vmatmul.mubr.bf16.gmra.mrb[0].mxu0 %v69
    %v113 = vpop.f32.mrb[0].mxu0
    %v114 = vadd.f32 0.0, %v113
    %v115 = vpop.f32.mrb[0].mxu0
    %v116 = vpop.f32.mrb[0].mxu0
    %v117 = vadd.f32 0.0, %v116
    %v118 = vpop.f32.mrb[0].mxu0
    %119 = vdwg.mxu0
    %v120 = vpack.c.bf16 %v37, %v37
    %v121 = vld [vmem:[%s3] sm:$0xf]
    %v122 = vld [vmem:[%s3 + $0x4] sm:$0xf]
    %v123 = vld [vmem:[%s3 + $0x8] sm:$0xf]
    %v127 = vunpack.c.l.b16 %v121
    %v128 = vunpack.c.l.b16 %v122
    %v129 = vunpack.c.l.b16 %v123
    %v130 = vpack.c.b16 %v128, %v127
    %v131 = vpack.c.b16 %v129, %v129
    %vm133 = vcmask 195584
    %v135 = vsel %vm133, %v120, 0
    %vm137 = vcmask 1043456
    %v139 = vsel %vm137, %v131, 0
    %141 = vmatprep.subr.bf16.mxu0 0
    %142 = vmatpush1.bf16.msra.mxu0 %v130
    %143 = vmatprep.subr.bf16.mxu0 0
    %144 = vmatpush1.bf16.msra.mxu0 %v139
    %145 = vmatprep.subr.bf16.mxu0 0
    %146 = vmatpush1.bf16.msra.mxu0 0
    %147 = vmatprep.subr.bf16.mxu0 0
    %148 = vmatpush1.bf16.msra.mxu0 0
    %149 = vmatprep.subr.bf16.mxu0 0
    %150 = vmatpush1.bf16.msra.mxu0 0
    %151 = vmatprep.subr.bf16.mxu0 0
    %152 = vmatpush1.bf16.msra.mxu0 0
    %153 = vmatprep.subr.bf16.mxu0 0
    %154 = vmatpush1.bf16.msra.mxu0 0
    %155 = vmatprep.subr.bf16.mxu0 0
    %156 = vmatpush1.bf16.msra.mxu0 0
    %157 = vmatprep.subr.bf16.mxu0 0
    %158 = vmatpush1.bf16.msra.mxu0 0
    %159 = vmatprep.subr.bf16.mxu0 0
    %160 = vmatpush1.bf16.msra.mxu0 0
    %161 = vmatprep.subr.bf16.mxu0 0
    %162 = vmatpush1.bf16.msra.mxu0 0
    %163 = vmatprep.subr.bf16.mxu0 0
    %164 = vmatpush1.bf16.msra.mxu0 0
    %165 = vmatprep.subr.bf16.mxu0 0
    %166 = vmatpush1.bf16.msra.mxu0 0
    %167 = vmatprep.subr.bf16.mxu0 0
    %168 = vmatpush1.bf16.msra.mxu0 0
    %169 = vmatprep.subr.bf16.mxu0 0
    %170 = vmatpush1.bf16.msra.mxu0 0
    %171 = vmatprep.subr.bf16.mxu0 0
    %172 = vmatpush1.bf16.msra.mxu0 0
    %173 = vmatprep.mubr.bf16.mxu0 0
    %174 = vmatmul.mubr.bf16.gmra.mrb[0].mxu0 %v135
    %v175 = vpop.f32.mrb[0].mxu0
    %v176 = vadd.f32 0.0, %v175
    %v177 = vpop.f32.mrb[0].mxu0
    %v178 = vpop.f32.mrb[0].mxu0
    %v179 = vpop.f32.mrb[0].mxu0
    %180 = vdwg.mxu0
    %v183 = vunpack.c.l.s4 1966171168
    %v184 = vunpack.c.0.s8 %v183
    %v185 = vlaneseq
    %v186 = vshrl.u32 %v185, 7
    %v187 = vsub.s32 %v184, %v186
    %v188 = vrot.slane %v176, %v187
    %v189 = vcombine.high %v188, %v188
    %v191 = vunpack.c.l.s4 1966171168
    %v192 = vunpack.c.0.s8 %v191
    %v193 = vlaneseq
    %v194 = vshrl.u32 %v193, 7
    %v195 = vsub.s32 %v192, %v194
    %v196 = vrot.slane %v188, %v195
    %v198 = vunpack.c.l.s4 1966171168
    %v199 = vunpack.c.0.s8 %v198
    %v200 = vlaneseq
    %v201 = vshrl.u32 %v200, 7
    %v202 = vsub.s32 %v199, %v201
    %v203 = vrot.slane %v189, %v202
    %v204 = vlaneseq
    %v205 = vshrl.u32 %v204, 7
    %v206 = vsub.s32 0, %v205
    %v207 = vrot.slane %v196, %v206
    %v208 = vlaneseq
    %v209 = vshrl.u32 %v208, 7
    %v210 = vsub.s32 0, %v209
    %v211 = vrot.slane %v203, %v210
    %v214 = vadd.f32 %v106, %v207
    %v215 = vadd.f32 %v109, %v207
    %v216 = vadd.f32 %v114, %v211
    %v217 = vadd.f32 %v117, %v211
    %v218 = vld [vmem:[%s4] sm:$0x1]
    %v220 = vlaneseq
    %v221 = vshrl.u32 %v220, 7
    %v222 = vsub.s32 0, %v221
    %v223 = vrot.slane %v218, %v222
    %v225 = vadd.f32 %v214, %v223
    %v226 = vadd.f32 %v215, %v223
    %v227 = vadd.f32 %v216, %v223
    %v228 = vadd.f32 %v217, %v223
    %v229 = vmax.f32 %v225, 0.0
    %v230 = vmax.f32 %v226, 0.0
    %v231 = vmax.f32 %v227, 0.0
    %v232 = vmax.f32 %v228, 0.0
    %v233 = vld [vmem:[%s5] sm:$0x1]
    %v235 = vlaneseq
    %v236 = vshrl.u32 %v235, 7
    %v237 = vsub.s32 0, %v236
    %v238 = vrot.slane %v233, %v237
    %v240 = vmul.f32 %v229, %v238
    %v241 = vmul.f32 %v230, %v238
    %v242 = vmul.f32 %v231, %v238
    %v243 = vmul.f32 %v232, %v238
    %vm244 = vcmask 130048
    %v245 = vsel %vm244, %v240, 0.0
    %246 = vadd.xlane.f32.xlu0 %v245
    %v247 = vpop.xlane.xlu0 %246
    %v248 = vsel %vm244, %v241, 0.0
    %249 = vadd.xlane.f32.xlu0 %v248
    %v250 = vpop.xlane.xlu0 %249
    %v251 = vsel %vm244, %v242, 0.0
    %252 = vadd.xlane.f32.xlu0 %v251
    %v253 = vpop.xlane.xlu0 %252
    %v254 = vsel %vm244, %v243, 0.0
    %255 = vadd.xlane.f32.xlu0 %v254
    %v256 = vpop.xlane.xlu0 %255
    %v257 = vld [vmem:[#allocation2] sm:$0x1]
    %v259 = vlaneseq
    %v260 = vshrl.u32 %v259, 7
    %v261 = vsub.s32 0, %v260
    %v262 = vrot.slane %v257, %v261
    %263 = vset.pattern.permute.xlu0 0
    %264 = vperm.xlu0 %263, %v262
    %v265 = vpop.permute.xlu0 %264
    %v267 = vadd.f32 %v247, %v265
    %v268 = vadd.f32 %v250, %v265
    %v269 = vadd.f32 %v253, %v265
    %v270 = vadd.f32 %v256, %v265
    %v275 = vlaneseq
    %v276 = vand.u32 %v275, 127
    %v277 = vlaneseq
    %v278 = vshrl.u32 %v277, 7
    %v279 = vsub.s32 %v276, %v278
    %v280 = vrot.slane %v267, %v279
    %v281 = vadd.s32 %v276, 4294967288
    %v282 = vlaneseq
    %v283 = vshrl.u32 %v282, 7
    %v284 = vsub.s32 %v281, %v283
    %v285 = vrot.slane %v268, %v284
    %vm286 = vcmask 130112
    %v287 = vsel %vm286, %v285, %v280
    %v288 = vlaneseq
    %v289 = vshrl.u32 %v288, 7
    %v290 = vsub.s32 %v276, %v289
    %v291 = vrot.slane %v269, %v290
    %v292 = vlaneseq
    %v293 = vshrl.u32 %v292, 7
    %v294 = vsub.s32 %v281, %v293
    %v295 = vrot.slane %v270, %v294
    %v296 = vsel %vm286, %v295, %v291
    %vm297 = vcmask 1041409
    %v298 = vsel %vm297, %v296, %v287
    %vm300 = vcmask 123904
    %v301 = vsel %vm300, %v298, -inf
    %302 = vmax.xlane.f32.xlu0 %v301
    %v303 = vpop.xlane.xlu0 %302
    %v305 = vlaneseq
    %v306 = vshrl.u32 %v305, 7
    %v307 = vsub.s32 0, %v306
    %v308 = vrot.slane %v303, %v307
    %v309 = vlaneseq
    %v310 = vshrl.u32 %v309, 7
    %v311 = vsub.s32 1, %v310
    %v312 = vrot.slane %v303, %v311
    %v315 = vsub.f32 %v267, %v308
    %v316 = vsub.f32 %v268, %v308
    %v317 = vsub.f32 %v269, %v312
    %v318 = vsub.f32 %v270, %v312
    %v319 = vmul.f32 %v315, 1.442695
    %v320 = vpow.pop %v319
    %v321 = vmul.f32 %v316, 1.442695
    %v322 = vpow.pop %v321
    %v323 = vmul.f32 %v317, 1.442695
    %v324 = vpow.pop %v323
    %v325 = vmul.f32 %v318, 1.442695
    %v326 = vpow.pop %v325
    %331 = vset.pattern.permute.xlu0 0
    %332 = vperm.xlu0 %331, %v320
    %v333 = vpop.permute.xlu0 %332
    %334 = vset.pattern.permute.xlu0 0
    %335 = vperm.xlu0 %334, %v322
    %v336 = vpop.permute.xlu0 %335
    %337 = vset.pattern.permute.xlu0 0
    %338 = vperm.xlu0 %337, %v324
    %v339 = vpop.permute.xlu0 %338
    %340 = vset.pattern.permute.xlu0 0
    %341 = vperm.xlu0 %340, %v326
    %v342 = vpop.permute.xlu0 %341
    %v343 = vlaneseq
    %v344 = vshrl.u32 %v343, 7
    %v345 = vsub.s32 %v276, %v344
    %v346 = vrot.slane %v333, %v345
    %v347 = vlaneseq
    %v348 = vshrl.u32 %v347, 7
    %v349 = vsub.s32 %v281, %v348
    %v350 = vrot.slane %v336, %v349
    %v351 = vsel %vm286, %v350, %v346
    %v352 = vlaneseq
    %v353 = vshrl.u32 %v352, 7
    %v354 = vsub.s32 %v276, %v353
    %v355 = vrot.slane %v339, %v354
    %v356 = vlaneseq
    %v357 = vshrl.u32 %v356, 7
    %v358 = vsub.s32 %v281, %v357
    %v359 = vrot.slane %v342, %v358
    %v360 = vsel %vm286, %v359, %v355
    %v361 = vsel %vm297, %v360, %v351
    %v363 = vsel %vm300, %v361, 0.0
    %364 = vadd.xlane.f32.xlu0 %v363
    %v365 = vpop.xlane.xlu0 %364
    %v366 = vrcp.pop %v365
    %v368 = vlaneseq
    %v369 = vshrl.u32 %v368, 7
    %v370 = vsub.s32 0, %v369
    %v371 = vrot.slane %v366, %v370
    %v372 = vlaneseq
    %v373 = vshrl.u32 %v372, 7
    %v374 = vsub.s32 1, %v373
    %v375 = vrot.slane %v366, %v374
    %v378 = vmul.f32 %v320, %v371
    %v379 = vmul.f32 %v322, %v371
    %v380 = vmul.f32 %v324, %v375
    %v381 = vmul.f32 %v326, %v375
    %v382 = vpack.c.bf16 %v379, %v378
    %v383 = vpack.c.bf16 %v381, %v380
    %v385 = vunpack.c.l.b16 %v382
    %v386 = vunpack.c.h.b16 %v382
    %387 = vset.pattern.permute.xlu0 0
    %388 = vperm.xlu0 %387, %v385
    %v389 = vpop.permute.xlu0 %388
    %390 = vset.pattern.permute.xlu0 0
    %391 = vperm.xlu0 %390, %v386
    %v392 = vpop.permute.xlu0 %391
    %v393 = vlaneseq
    %v394 = vshrl.u32 %v393, 7
    %v395 = vsub.s32 %v276, %v394
    %v396 = vrot.slane %v389, %v395
    %v397 = vlaneseq
    %v398 = vshrl.u32 %v397, 7
    %v399 = vsub.s32 %v281, %v398
    %v400 = vrot.slane %v392, %v399
    %v401 = vsel %vm286, %v400, %v396
    %v402 = vpack.c.b16 %v401, %v401
    %v405 = vsel %vm244, %v402, 0
    %407 = vmatprep.subr.bf16.mxu0 0
    %408 = vmatpush1.bf16.msra.mxu0 %v50
    %409 = vmatprep.subr.bf16.mxu0 0
    %410 = vmatpush1.bf16.msra.mxu0 0
    %411 = vmatprep.subr.bf16.mxu0 0
    %412 = vmatpush1.bf16.msra.mxu0 0
    %413 = vmatprep.subr.bf16.mxu0 0
    %414 = vmatpush1.bf16.msra.mxu0 0
    %415 = vmatprep.subr.bf16.mxu0 0
    %416 = vmatpush1.bf16.msra.mxu0 0
    %417 = vmatprep.subr.bf16.mxu0 0
    %418 = vmatpush1.bf16.msra.mxu0 0
    %419 = vmatprep.subr.bf16.mxu0 0
    %420 = vmatpush1.bf16.msra.mxu0 0
    %421 = vmatprep.subr.bf16.mxu0 0
    %422 = vmatpush1.bf16.msra.mxu0 0
    %423 = vmatprep.subr.bf16.mxu0 0
    %424 = vmatpush1.bf16.msra.mxu0 0
    %425 = vmatprep.subr.bf16.mxu0 0
    %426 = vmatpush1.bf16.msra.mxu0 0
    %427 = vmatprep.subr.bf16.mxu0 0
    %428 = vmatpush1.bf16.msra.mxu0 0
    %429 = vmatprep.subr.bf16.mxu0 0
    %430 = vmatpush1.bf16.msra.mxu0 0
    %431 = vmatprep.subr.bf16.mxu0 0
    %432 = vmatpush1.bf16.msra.mxu0 0
    %433 = vmatprep.subr.bf16.mxu0 0
    %434 = vmatpush1.bf16.msra.mxu0 0
    %435 = vmatprep.subr.bf16.mxu0 0
    %436 = vmatpush1.bf16.msra.mxu0 0
    %437 = vmatprep.subr.bf16.mxu0 0
    %438 = vmatpush1.bf16.msra.mxu0 0
    %439 = vmatprep.mubr.bf16.mxu0 0
    %440 = vmatmul.mubr.bf16.gmra.mrb[0].mxu0 %v405
    %v441 = vpop.f32.mrb[0].mxu0
    %v442 = vadd.f32 0.0, %v441
    %v443 = vpop.f32.mrb[0].mxu0
    %v444 = vpop.f32.mrb[0].mxu0
    %v445 = vpop.f32.mrb[0].mxu0
    %446 = vdwg.mxu0
    %v448 = vunpack.c.l.b16 %v383
    %v449 = vunpack.c.h.b16 %v383
    %450 = vset.pattern.permute.xlu0 0
    %451 = vperm.xlu0 %450, %v448
    %v452 = vpop.permute.xlu0 %451
    %453 = vset.pattern.permute.xlu0 0
    %454 = vperm.xlu0 %453, %v449
    %v455 = vpop.permute.xlu0 %454
    %v456 = vlaneseq
    %v457 = vshrl.u32 %v456, 7
    %v458 = vsub.s32 %v276, %v457
    %v459 = vrot.slane %v452, %v458
    %v460 = vlaneseq
    %v461 = vshrl.u32 %v460, 7
    %v462 = vsub.s32 %v281, %v461
    %v463 = vrot.slane %v455, %v462
    %v464 = vsel %vm286, %v463, %v459
    %v465 = vpack.c.b16 %v464, %v464
    %v468 = vsel %vm244, %v465, 0
    %470 = vmatprep.subr.bf16.mxu0 0
    %471 = vmatpush1.bf16.msra.mxu0 %v51
    %472 = vmatprep.subr.bf16.mxu0 0
    %473 = vmatpush1.bf16.msra.mxu0 0
    %474 = vmatprep.subr.bf16.mxu0 0
    %475 = vmatpush1.bf16.msra.mxu0 0
    %476 = vmatprep.subr.bf16.mxu0 0
    %477 = vmatpush1.bf16.msra.mxu0 0
    %478 = vmatprep.subr.bf16.mxu0 0
    %479 = vmatpush1.bf16.msra.mxu0 0
    %480 = vmatprep.subr.bf16.mxu0 0
    %481 = vmatpush1.bf16.msra.mxu0 0
    %482 = vmatprep.subr.bf16.mxu0 0
    %483 = vmatpush1.bf16.msra.mxu0 0
    %484 = vmatprep.subr.bf16.mxu0 0
    %485 = vmatpush1.bf16.msra.mxu0 0
    %486 = vmatprep.subr.bf16.mxu0 0
    %487 = vmatpush1.bf16.msra.mxu0 0
    %488 = vmatprep.subr.bf16.mxu0 0
    %489 = vmatpush1.bf16.msra.mxu0 0
    %490 = vmatprep.subr.bf16.mxu0 0
    %491 = vmatpush1.bf16.msra.mxu0 0
    %492 = vmatprep.subr.bf16.mxu0 0
    %493 = vmatpush1.bf16.msra.mxu0 0
    %494 = vmatprep.subr.bf16.mxu0 0
    %495 = vmatpush1.bf16.msra.mxu0 0
    %496 = vmatprep.subr.bf16.mxu0 0
    %497 = vmatpush1.bf16.msra.mxu0 0
    %498 = vmatprep.subr.bf16.mxu0 0
    %499 = vmatpush1.bf16.msra.mxu0 0
    %500 = vmatprep.subr.bf16.mxu0 0
    %501 = vmatpush1.bf16.msra.mxu0 0
    %502 = vmatprep.mubr.bf16.mxu0 0
    %503 = vmatmul.mubr.bf16.gmra.mrb[0].mxu0 %v468
    %v504 = vpop.f32.mrb[0].mxu0
    %v505 = vadd.f32 0.0, %v504
    %v506 = vpop.f32.mrb[0].mxu0
    %v507 = vpop.f32.mrb[0].mxu0
    %v508 = vpop.f32.mrb[0].mxu0
    %509 = vdwg.mxu0
    %v512 = vrot.slane %v505, 7
    %v513 = vsel %vm297, %v512, %v442
    %vm515 = vcmask 254976
    %516 = vst.msk [vmem:[#allocation3] sm:$0x3] %vm515, %v513
    %521 = vset.pattern.permute.xlu0 0
    %522 = vperm.xlu0 %521, %v378
    %v523 = vpop.permute.xlu0 %522
    %524 = vset.pattern.permute.xlu0 0
    %525 = vperm.xlu0 %524, %v379
    %v526 = vpop.permute.xlu0 %525
    %527 = vset.pattern.permute.xlu0 0
    %528 = vperm.xlu0 %527, %v380
    %v529 = vpop.permute.xlu0 %528
    %530 = vset.pattern.permute.xlu0 0
    %531 = vperm.xlu0 %530, %v381
    %v532 = vpop.permute.xlu0 %531
    %v533 = vlaneseq
    %v534 = vshrl.u32 %v533, 7
    %v535 = vsub.s32 %v276, %v534
    %v536 = vrot.slane %v523, %v535
    %v537 = vlaneseq
    %v538 = vshrl.u32 %v537, 7
    %v539 = vsub.s32 %v281, %v538
    %v540 = vrot.slane %v526, %v539
    %v541 = vsel %vm286, %v540, %v536
    %v542 = vlaneseq
    %v543 = vshrl.u32 %v542, 7
    %v544 = vsub.s32 %v276, %v543
    %v545 = vrot.slane %v529, %v544
    %v546 = vlaneseq
    %v547 = vshrl.u32 %v546, 7
    %v548 = vsub.s32 %v281, %v547
    %v549 = vrot.slane %v532, %v548
    %v550 = vsel %vm286, %v549, %v545
    %v551 = vsel %vm297, %v550, %v541
    %553 = vst.msk [vmem:[#allocation5] sm:$0x3] %vm300, %v551
    // Predicated region
    $region30: #{tpu_custom_call.1} parent=1 // pred_check
      _
    $region31: #{tpu_custom_call.1} parent=1 // pred_check_branch
      %555 = sbr.rel (0) target = $region33
    $region32: #{tpu_custom_call.1} parent=1 // pred_region
      %s557 = ssub.s32 32, 32
      %558 = vsyncadd [#allocation4], %s557
      %s560 = sshll.u32 [#allocation3], 4
      %s561 = int_to_ptr.vmem [resolvable:$true] %s560
      %563 = dma.vmem_to_hbm [thread:$0]  %s561, 32, %s7, [#allocation4]
    $region33: #{tpu_custom_call.1} parent=1 // pred_fallthru
      _
    // Predicated region
    $region34: #{tpu_custom_call.1} parent=1 // pred_check
      _
    $region35: #{tpu_custom_call.1} parent=1 // pred_check_branch
      %565 = sbr.rel (0) target = $region37
    $region36: #{tpu_custom_call.1} parent=1 // pred_region
      %s567 = ssub.s32 32, 32
      %568 = vsyncadd [#allocation6], %s567
      %s570 = sshll.u32 [#allocation5], 4
      %s571 = int_to_ptr.vmem [resolvable:$true] %s570
      %573 = dma.vmem_to_hbm [thread:$0]  %s571, 32, %s8, [#allocation6]
    $region37: #{tpu_custom_call.1} parent=1 // pred_fallthru
      _
    // Predicated region
    $region38: #{tpu_custom_call.1} parent=1 // pred_check
      _
    $region39: #{tpu_custom_call.1} parent=1 // pred_check_branch
      %575 = sbr.rel (0) target = $region41
    $region40: #{tpu_custom_call.1} parent=1 // pred_region
      %576 = dma.done [#allocation4], 32
    $region41: #{tpu_custom_call.1} parent=1 // pred_fallthru
      _
    // Predicated region
    $region42: #{tpu_custom_call.1} parent=1 // pred_check
      _
    $region43: #{tpu_custom_call.1} parent=1 // pred_check_branch
      %578 = sbr.rel (0) target = $region45
    $region44: #{tpu_custom_call.1} parent=1 // pred_region
      %579 = dma.done [#allocation6], 32
    $region45: #{tpu_custom_call.1} parent=1 // pred_fallthru
      _
    %580 = vsyncpa [#allocation4], 1
    %581 = vsyncpa [#allocation6], 1

</llo_original>
